<compile_context>
chip_gen: v7x
topology: tpu7x:2x2x1
jax: 0.10.0
libtpu: 0.0.40
codegen_flags: <defaults>
</compile_context>

<pallas_src>
import functools

import jax
import jax.numpy as jnp
from jax.experimental import pallas as pl
from jax.experimental.pallas import tpu as pltpu

# f = [-112, -913, -2047, 0, 2047, 913, 112] / 8418   (length-7 derivative tap)
_F = tuple(v / 8418.0 for v in (-112.0, -913.0, -2047.0, 0.0, 2047.0, 913.0, 112.0))
_F1, _F2, _F3 = _F[4], _F[5], _F[6]          # antisymmetric: f[3+m] == -f[3-m], f[3] == 0


# ---------------------------------------------------------------------------
# VMEM budgeting (capacity-aware, with a hard guard against oversized blocks).
# ---------------------------------------------------------------------------
def _vmem_capacity_bytes():
    try:
        cap = getattr(pltpu.get_tpu_info(), "vmem_capacity_bytes", None)
        if cap:
            return int(cap)
    except Exception:
        pass
    return 64 << 20          # conservative floor = v7x per-TC VMEM


def _budgets():
    cap = _vmem_capacity_bytes()
    cap_avail = max(cap - (8 << 20), 16 << 20)      # physical minus headroom
    # ~14-16x the f32 slab is resident (double-buffered input + 2 double-
    # buffered outputs + f32 temporaries); /24 gives ~2.3 MiB slabs on v7x
    # (64 MiB VMEM) and ~5 MiB slabs on v5e/v6e (128 MiB), per the review.
    slab_budget = min(8 << 20, cap_avail // 24)
    return cap_avail, slab_budget


def _vmem_limit(block_f32_elems, cap_avail):
    need = 16 * 4 * block_f32_elems + (4 << 20)
    return int(min(cap_avail, max(need, 32 << 20)))


# ---------------------------------------------------------------------------
# Main path: several images folded into one block per grid step.
# ---------------------------------------------------------------------------
def _pick_images_per_block(B, H, W, slab_budget):
    """Largest divisor tb of B whose (tb, H, W) f32 slab fits the budget,
    preferring choices that leave >= 2 (ideally even) grid steps so the
    "parallel" batch axis pipelines and shards across both v7x TensorCores."""
    per_img = H * W * 4
    if per_img > slab_budget:          # hard guard: whole-image block too big
        return None
    divs = [d for d in range(1, B + 1) if B % d == 0 and d * per_img <= slab_budget]
    even_g = [d for d in divs if (B // d) >= 2 and (B // d) % 2 == 0]
    ge2_g = [d for d in divs if (B // d) >= 2]
    for cand in (even_g, ge2_g, divs):
        if cand:
            return max(cand)
    return None


def _folded_kernel(x_ref, ix_ref, iy_ref, *, border, h_out, w_out):
    """x_ref: (tb, H, W);  ix_ref / iy_ref: (tb, h_out, w_out)."""
    xs = x_ref[...].astype(jnp.float32)

    # Horizontal gradient: crop interior rows once, then 6 lane-shifted taps.
    rows = xs[:, border:border + h_out, :]
    ix = _F1 * (rows[:, :, border + 1:border + 1 + w_out]
                - rows[:, :, border - 1:border - 1 + w_out])
    ix = ix + _F2 * (rows[:, :, border + 2:border + 2 + w_out]
                     - rows[:, :, border - 2:border - 2 + w_out])
    ix = ix + _F3 * (rows[:, :, border + 3:border + 3 + w_out]
                     - rows[:, :, border - 3:border - 3 + w_out])
    ix_ref[...] = ix.astype(ix_ref.dtype)

    # Vertical gradient: crop interior columns once, then 6 sublane-shifted taps.
    cols = xs[:, :, border:border + w_out]
    iy = _F1 * (cols[:, border + 1:border + 1 + h_out, :]
                - cols[:, border - 1:border - 1 + h_out, :])
    iy = iy + _F2 * (cols[:, border + 2:border + 2 + h_out, :]
                     - cols[:, border - 2:border - 2 + h_out, :])
    iy = iy + _F3 * (cols[:, border + 3:border + 3 + h_out, :]
                     - cols[:, border - 3:border - 3 + h_out, :])
    iy_ref[...] = iy.astype(iy_ref.dtype)


def _image_gradients_folded(x, border, tb, out_dtype, cap_avail):
    B, H, W = x.shape
    h_out, w_out = H - 2 * border, W - 2 * border
    G = B // tb
    kernel = functools.partial(_folded_kernel, border=border,
                               h_out=h_out, w_out=w_out)
    return pl.pallas_call(
        kernel,
        out_shape=(jax.ShapeDtypeStruct((B, h_out, w_out), out_dtype),
                   jax.ShapeDtypeStruct((B, h_out, w_out), out_dtype)),
        grid=(G,),
        # TODO(synk): try pipeline_mode=pl.Buffered(3) on the input spec if
        # xprof shows exposed input DMA on v7x (3.2 TB/s HBM, light compute).
        in_specs=[pl.BlockSpec((tb, H, W), lambda g: (g, 0, 0))],
        out_specs=(pl.BlockSpec((tb, h_out, w_out), lambda g: (g, 0, 0)),
                   pl.BlockSpec((tb, h_out, w_out), lambda g: (g, 0, 0))),
        compiler_params=pltpu.CompilerParams(
            dimension_semantics=("parallel",),
            vmem_limit_bytes=_vmem_limit(tb * H * W, cap_avail)),
    )(x)


# ---------------------------------------------------------------------------
# Large-image path: row-tiled halo windows, manual double-buffered DMA.
# ---------------------------------------------------------------------------
def _pick_row_tile(h_out, W, slab_budget):
    cands = [d for d in range(8, h_out + 1, 8) if h_out % d == 0]
    if not cands:
        return None
    fitting = [d for d in cands if (d + 6) * W * 4 <= slab_budget]
    return max(fitting) if fitting else min(cands)


def _rowtiled_kernel(x_hbm, ix_ref, iy_ref, xbuf, sem, *, border, tr, w_out, nwin):
    """x_hbm: (B, H, W) raw HBM ref;  ix_ref / iy_ref: (tr, w_out) VMEM blocks.
    xbuf: (2, nwin, W) double buffer (nwin = tr + 6);  sem: (2,) DMA sems."""
    b = pl.program_id(0)
    t = pl.program_id(1)
    nt = pl.num_programs(1)
    slot = t % 2

    def copy(tile, slot_):
        row0 = tile * tr + (border - 3)          # top row of the halo window
        return pltpu.make_async_copy(x_hbm.at[b, pl.ds(row0, nwin), :],
                                     xbuf.at[slot_], sem.at[slot_])

    @pl.when(t == 0)                             # prime the pipeline
    def _():
        copy(t, slot).start()

    @pl.when(t + 1 < nt)                         # prefetch the next row tile
    def _():
        copy(t + 1, 1 - slot).start()

    copy(t, slot).wait()                         # current window is ready

    win = xbuf[slot].astype(jnp.float32)         # (nwin, W); centre rows 3..3+tr

    rows = win[3:3 + tr, :]
    ix = _F1 * (rows[:, border + 1:border + 1 + w_out]
                - rows[:, border - 1:border - 1 + w_out])
    ix = ix + _F2 * (rows[:, border + 2:border + 2 + w_out]
                     - rows[:, border - 2:border - 2 + w_out])
    ix = ix + _F3 * (rows[:, border + 3:border + 3 + w_out]
                     - rows[:, border - 3:border - 3 + w_out])
    ix_ref[...] = ix.astype(ix_ref.dtype)

    cols = win[:, border:border + w_out]
    iy = _F1 * (cols[4:4 + tr, :] - cols[2:2 + tr, :])
    iy = iy + _F2 * (cols[5:5 + tr, :] - cols[1:1 + tr, :])
    iy = iy + _F3 * (cols[6:6 + tr, :] - cols[0:tr, :])
    iy_ref[...] = iy.astype(iy_ref.dtype)


def _image_gradients_rowtiled(x, border, out_dtype, cap_avail, slab_budget,
                              row_tile=None):
    B, H, W = x.shape
    h_out, w_out = H - 2 * border, W - 2 * border
    tr = row_tile if row_tile is not None else _pick_row_tile(h_out, W, slab_budget)
    if tr is None:
        # TODO(synk): h_out has no multiple-of-8 divisor; best-effort whole-image
        # block (may be VMEM-hungry for pathological shapes).
        return _image_gradients_folded(x, border, 1, out_dtype, cap_avail)
    assert tr % 8 == 0 and h_out % tr == 0
    nwin = tr + 6
    n_t = h_out // tr

    kernel = functools.partial(_rowtiled_kernel, border=border, tr=tr,
                               w_out=w_out, nwin=nwin)
    return pl.pallas_call(
        kernel,
        out_shape=(jax.ShapeDtypeStruct((B, h_out, w_out), out_dtype),
                   jax.ShapeDtypeStruct((B, h_out, w_out), out_dtype)),
        grid=(B, n_t),
        in_specs=[pl.BlockSpec(memory_space=pl.ANY)],     # raw HBM ref, manual DMA
        out_specs=(pl.BlockSpec((None, tr, w_out), lambda b, t: (b, t, 0)),
                   pl.BlockSpec((None, tr, w_out), lambda b, t: (b, t, 0))),
        scratch_shapes=[pltpu.VMEM((2, nwin, W), x.dtype),
                        pltpu.SemaphoreType.DMA((2,))],
        compiler_params=pltpu.CompilerParams(
            dimension_semantics=("parallel", "arbitrary"),
            vmem_limit_bytes=_vmem_limit(nwin * W, cap_avail)),
    )(x)


# ---------------------------------------------------------------------------
# Public entry point.
# ---------------------------------------------------------------------------
def image_gradients(x, border, *, out_dtype=None,
                    _force_row_tiled=False, _row_tile=None):
    """Pallas equivalent of ImageGradients(border)(x);  x: (B, H, W).

    Returns (Ix, Iy), each (B, H - 2*border, W - 2*border).  Accumulation is
    always f32; pass out_dtype=jnp.bfloat16 to halve output HBM traffic when
    the consumer tolerates bf16 gradients.
    """
    assert border > 3
    B, H, W = x.shape
    h_out, w_out = H - 2 * border, W - 2 * border
    assert h_out > 0 and w_out > 0
    out_dtype = x.dtype if out_dtype is None else out_dtype

    cap_avail, slab_budget = _budgets()
    tb = None if _force_row_tiled else _pick_images_per_block(B, H, W, slab_budget)
    if tb is not None:
        return _image_gradients_folded(x, border, tb, out_dtype, cap_avail)
    return _image_gradients_rowtiled(x, border, out_dtype, cap_avail, slab_budget,
                                     row_tile=_row_tile)


# ---------------------------------------------------------------------------
# Plain-JAX reference (same semantics as the torch module) + smoke tests.
# ---------------------------------------------------------------------------
def _reference(x, border):
    B, H, W = x.shape
    h_out, w_out = H - 2 * border, W - 2 * border
    xf = x.astype(jnp.float32)
    ix = jnp.zeros((B, h_out, w_out), jnp.float32)
    iy = jnp.zeros((B, h_out, w_out), jnp.float32)
    for k, fk in enumerate(_F):
        ix = ix + fk * xf[:, border:border + h_out,
                          border - 3 + k:border - 3 + k + w_out]
        iy = iy + fk * xf[:, border - 3 + k:border - 3 + k + h_out,
                          border:border + w_out]
    return ix, iy


if __name__ == "__main__":
    key = jax.random.PRNGKey(0)
    k1, k2, k3 = jax.random.split(key, 3)

    def _check(x, border, name, **kw):
        ix, iy = image_gradients(x, border, **kw)
        jax.block_until_ready((ix, iy))
        ix_ref, iy_ref = _reference(x, border)
        B, H, W = x.shape
        assert ix.shape == (B, H - 2 * border, W - 2 * border), name
        assert iy.shape == (B, H - 2 * border, W - 2 * border), name
        assert jnp.allclose(ix.astype(jnp.float32), ix_ref, atol=1e-5, rtol=1e-5), name
        assert jnp.allclose(iy.astype(jnp.float32), iy_ref, atol=1e-5, rtol=1e-5), name

    # 1) tiny unaligned shape (folded path, small blocks, masked tail stores)
    _check(jax.random.normal(k1, (2, 16, 16), dtype=jnp.float32), 4, "small")
    # 2) lane-dense width with several images folded per grid step
    _check(jax.random.normal(k2, (8, 32, 256), dtype=jnp.float32), 5, "folded")
    # 3) row-tiled halo path with manual double-buffered DMA (forced small tile;
    #    normally only used for images too large for a whole-image block)
    _check(jax.random.normal(k3, (1, 64, 256), dtype=jnp.float32), 4, "rowtiled",
           _force_row_tiled=True, _row_tile=8)

    print("KERNEL_OK")
</pallas_src>

<mosaic_0001>
module attributes {stable_mosaic.version = 11 : i64} {
  func.func @_folded_kernel(%arg0: i32, %arg1: memref<1x16x16xf32, #tpu.memory_space<vmem>>, %arg2: memref<1x8x8xf32, #tpu.memory_space<vmem>>, %arg3: memref<1x8x8xf32, #tpu.memory_space<vmem>>) attributes {dimension_semantics = [#tpu.dimension_semantics<parallel>], iteration_bounds = array<i64: 2>, scalar_prefetch = 0 : i64, scratch_operands = 0 : i64, tpu.core_type = #tpu.core_type<tc>, window_params = [{transform_indices = @transform_0, window_bounds = array<i64: 1, 16, 16>}, {transform_indices = @transform_1, window_bounds = array<i64: 1, 8, 8>}, {transform_indices = @transform_2, window_bounds = array<i64: 1, 8, 8>}]} {
    %c0 = arith.constant 0 : index
    %c0_0 = arith.constant 0 : index
    %c0_1 = arith.constant 0 : index
    %0 = vector.load %arg1[%c0, %c0_0, %c0_1] : memref<1x16x16xf32, #tpu.memory_space<vmem>>, vector<1x16x16xf32>
    %1 = vector.extract_strided_slice %0 {offsets = [0, 4, 0], sizes = [1, 8, 16], strides = [1, 1, 1]} : vector<1x16x16xf32> to vector<1x8x16xf32>
    %2 = vector.extract_strided_slice %1 {offsets = [0, 0, 5], sizes = [1, 8, 8], strides = [1, 1, 1]} : vector<1x8x16xf32> to vector<1x8x8xf32>
    %3 = vector.extract_strided_slice %1 {offsets = [0, 0, 3], sizes = [1, 8, 8], strides = [1, 1, 1]} : vector<1x8x16xf32> to vector<1x8x8xf32>
    %4 = arith.subf %2, %3 : vector<1x8x8xf32>
    %cst = arith.constant 0.243169397 : f32
    %5 = vector.broadcast %cst : f32 to vector<1x8x8xf32>
    %6 = arith.mulf %5, %4 : vector<1x8x8xf32>
    %7 = vector.extract_strided_slice %1 {offsets = [0, 0, 6], sizes = [1, 8, 8], strides = [1, 1, 1]} : vector<1x8x16xf32> to vector<1x8x8xf32>
    %8 = vector.extract_strided_slice %1 {offsets = [0, 0, 2], sizes = [1, 8, 8], strides = [1, 1, 1]} : vector<1x8x16xf32> to vector<1x8x8xf32>
    %9 = arith.subf %7, %8 : vector<1x8x8xf32>
    %cst_2 = arith.constant 0.108458064 : f32
    %10 = vector.broadcast %cst_2 : f32 to vector<1x8x8xf32>
    %11 = arith.mulf %10, %9 : vector<1x8x8xf32>
    %12 = arith.addf %6, %11 : vector<1x8x8xf32>
    %13 = vector.extract_strided_slice %1 {offsets = [0, 0, 7], sizes = [1, 8, 8], strides = [1, 1, 1]} : vector<1x8x16xf32> to vector<1x8x8xf32>
    %14 = vector.extract_strided_slice %1 {offsets = [0, 0, 1], sizes = [1, 8, 8], strides = [1, 1, 1]} : vector<1x8x16xf32> to vector<1x8x8xf32>
    %15 = arith.subf %13, %14 : vector<1x8x8xf32>
    %cst_3 = arith.constant 0.0133048231 : f32
    %16 = vector.broadcast %cst_3 : f32 to vector<1x8x8xf32>
    %17 = arith.mulf %16, %15 : vector<1x8x8xf32>
    %18 = arith.addf %12, %17 : vector<1x8x8xf32>
    %c0_4 = arith.constant 0 : index
    %c0_5 = arith.constant 0 : index
    %c0_6 = arith.constant 0 : index
    %19 = vector.load %arg2[%c0_4, %c0_5, %c0_6] : memref<1x8x8xf32, #tpu.memory_space<vmem>>, vector<1x8x8xf32>
    tpu.vector_store %arg2[%c0_4, %c0_5, %c0_6], %18 {strides = array<i32>} : memref<1x8x8xf32, #tpu.memory_space<vmem>>, vector<1x8x8xf32>,
    %20 = vector.extract_strided_slice %0 {offsets = [0, 0, 4], sizes = [1, 16, 8], strides = [1, 1, 1]} : vector<1x16x16xf32> to vector<1x16x8xf32>
    %21 = vector.extract_strided_slice %20 {offsets = [0, 5, 0], sizes = [1, 8, 8], strides = [1, 1, 1]} : vector<1x16x8xf32> to vector<1x8x8xf32>
    %22 = vector.extract_strided_slice %20 {offsets = [0, 3, 0], sizes = [1, 8, 8], strides = [1, 1, 1]} : vector<1x16x8xf32> to vector<1x8x8xf32>
    %23 = arith.subf %21, %22 : vector<1x8x8xf32>
    %cst_7 = arith.constant 0.243169397 : f32
    %24 = vector.broadcast %cst_7 : f32 to vector<1x8x8xf32>
    %25 = arith.mulf %24, %23 : vector<1x8x8xf32>
    %26 = vector.extract_strided_slice %20 {offsets = [0, 6, 0], sizes = [1, 8, 8], strides = [1, 1, 1]} : vector<1x16x8xf32> to vector<1x8x8xf32>
    %27 = vector.extract_strided_slice %20 {offsets = [0, 2, 0], sizes = [1, 8, 8], strides = [1, 1, 1]} : vector<1x16x8xf32> to vector<1x8x8xf32>
    %28 = arith.subf %26, %27 : vector<1x8x8xf32>
    %cst_8 = arith.constant 0.108458064 : f32
    %29 = vector.broadcast %cst_8 : f32 to vector<1x8x8xf32>
    %30 = arith.mulf %29, %28 : vector<1x8x8xf32>
    %31 = arith.addf %25, %30 : vector<1x8x8xf32>
    %32 = vector.extract_strided_slice %20 {offsets = [0, 7, 0], sizes = [1, 8, 8], strides = [1, 1, 1]} : vector<1x16x8xf32> to vector<1x8x8xf32>
    %33 = vector.extract_strided_slice %20 {offsets = [0, 1, 0], sizes = [1, 8, 8], strides = [1, 1, 1]} : vector<1x16x8xf32> to vector<1x8x8xf32>
    %34 = arith.subf %32, %33 : vector<1x8x8xf32>
    %cst_9 = arith.constant 0.0133048231 : f32
    %35 = vector.broadcast %cst_9 : f32 to vector<1x8x8xf32>
    %36 = arith.mulf %35, %34 : vector<1x8x8xf32>
    %37 = arith.addf %31, %36 : vector<1x8x8xf32>
    %c0_10 = arith.constant 0 : index
    %c0_11 = arith.constant 0 : index
    %c0_12 = arith.constant 0 : index
    %38 = vector.load %arg3[%c0_10, %c0_11, %c0_12] : memref<1x8x8xf32, #tpu.memory_space<vmem>>, vector<1x8x8xf32>
    tpu.vector_store %arg3[%c0_10, %c0_11, %c0_12], %37 {strides = array<i32>} : memref<1x8x8xf32, #tpu.memory_space<vmem>>, vector<1x8x8xf32>,
    return
  }
  func.func @transform_0(%arg0: i32) -> (i32, i32, i32) {
    %c0_i32 = arith.constant 0 : i32
    %c0_i32_0 = arith.constant 0 : i32
    %c0_i32_1 = arith.constant 0 : i32
    return %arg0, %c0_i32, %c0_i32_0 : i32, i32, i32
  }
  func.func @transform_1(%arg0: i32) -> (i32, i32, i32) {
    %c0_i32 = arith.constant 0 : i32
    %c0_i32_0 = arith.constant 0 : i32
    %c0_i32_1 = arith.constant 0 : i32
    return %arg0, %c0_i32, %c0_i32_0 : i32, i32, i32
  }
  func.func @transform_2(%arg0: i32) -> (i32, i32, i32) {
    %c0_i32 = arith.constant 0 : i32
    %c0_i32_0 = arith.constant 0 : i32
    %c0_i32_1 = arith.constant 0 : i32
    return %arg0, %c0_i32, %c0_i32_0 : i32, i32, i32
  }
}

</mosaic_0001>

<llo_original>
// kernel: tpu_custom_call.1
$region0: #{tpu_custom_call.1}
  #allocation0 [shape = 'u32[]', space=smem, size = 0x4, offset = 0x4, fixed_abs, tag = 'smem constant byte address 0x4 - core index']
  #allocation1 [shape = 'u32[144,128]{1,0:T(1,128)}', space=vmem, size = 0x12000, scoped, tag = 'internal scratch']
  %s0 = inlined_call_operand.hbm [shape: f32[2,16,16], index: 0, kind: input, shape index: {}]
  %s1 = inlined_call_operand.hbm [shape: f32[2,8,8], index: 1, kind: output, shape index: {0}]
  %s2 = inlined_call_operand.hbm [shape: f32[2,8,8], index: 2, kind: output, shape index: {1}]
  %3 = xla_tuple %s1, %s2
  %s4 = sld [smem:[#allocation0]]
  $region49: #{tpu_custom_call.1} parent=0
    _
  %s6 = ssub.s32 1, %s4
  %s7 = scalar_select 0, %s6, %s4
  $region1: #{tpu_custom_call.1} parent=0
    #allocation2 [shape = 'u8[16384]{0}', space=vmem, size = 0x4000, scoped, tag = 'input window, operand 0']
    #allocation3 [shape = 's32[2]{0}', space=sflag, size = 0x8, scoped, tag = 'scoped memory for tpu_custom_call.1']
    #allocation4 [shape = 's32[2]{0}', space=sflag, size = 0x8, scoped, tag = 'scoped memory for tpu_custom_call.1']
    #allocation5 [shape = 'u8[8192]{0}', space=vmem, size = 0x2000, scoped, tag = 'output window, operand 0']
    #allocation6 [shape = 'u8[8192]{0}', space=vmem, size = 0x2000, scoped, tag = 'output window, operand 1']
    #allocation7 [shape = 's32[2]{0}', space=sflag, size = 0x8, scoped, tag = 'scoped memory for tpu_custom_call.1']
    %8 = vsyncpa [#allocation3], 0
    %s9 = scalar_lea.sflag [#allocation3], 1
    %10 = vsyncpa %s9, 0
    %11 = vsyncpa [#allocation4], 0
    %s12 = scalar_lea.sflag [#allocation4], 1
    %13 = vsyncpa %s12, 0
    %14 = vsyncpa [#allocation7], 0
    %s15 = scalar_lea.sflag [#allocation7], 1
    %16 = vsyncpa %s15, 0
    loop: start=0, step=1, limit=4
    $region2: #{tpu_custom_call.1} parent=1 // loop_pre_header
      _
    $region3: #{tpu_custom_call.1} parent=1 // loop_header
      %s18 = sphi 0, %s22
      %p19 = scmp.ge.s32.totalorder %s18, 4
      %s28 = sphi 0, %s30
      %s31 = sphi 0, %s28
      %s32 = sphi 0, %s31
      %s48 = sphi 0, %s32
      %s54 = sphi 0, %s56
      %s57 = sphi 0, %s54
      %s58 = sphi 0, %s57
      %s74 = sphi 0, %s58
      %s80 = sphi 0, %s82
      %s83 = sphi 0, %s80
      %s84 = sphi 0, %s83
      %s100 = sphi 0, %s84
    $region4: #{tpu_custom_call.1} parent=1 // loop_header_branch
      %21 = sbr.rel (%p19) target = $region8
    $region5: #{tpu_custom_call.1} parent=1 // loop_body
      %s23 = ssub.s32 %s18, 1
      %s24 = ssub.s32 %s18, 2
      %s25 = sadd.s32 %s18, 1
      %s26 = ssub.s32 %s18, %s25
      %p27 = scmp.eq.s32.totalorder %s26, 0
      %s29 = sadd.s32 %s28, 1
      %s30 = scalar_select %p27, %s28, %s29
      %p33 = pneg %p27
      %p34 = scmp.eq.s32.totalorder %s18, 1
      %p35 = por %p33, %p34
      %p36 = scmp.ne.s32.totalorder %s28, %s31
      %p37 = scmp.eq.s32.totalorder %s18, 0
      %p38 = por %p36, %p37
      %p39 = scmp.ne.s32.totalorder %s28, %s31
      %p40 = scmp.eq.s32.totalorder %s23, 1
      %p41 = por %p39, %p40
      %p42 = scmp.ne.s32.totalorder %s31, %s32
      %p43 = scmp.eq.s32.totalorder %s23, 0
      %p44 = por %p42, %p43
      %p45 = scmp.ne.s32.totalorder %s31, %s32
      %p46 = scmp.eq.s32.totalorder %s24, 1
      %p47 = por %p45, %p46
      %p49 = scmp.ne.s32.totalorder %s32, %s48
      %p50 = scmp.eq.s32.totalorder %s24, 0
      %p51 = por %p49, %p50
      %s52 = ssub.s32 %s18, %s25
      %p53 = scmp.eq.s32.totalorder %s52, 0
      %s55 = sadd.s32 %s54, 1
      %s56 = scalar_select %p53, %s54, %s55
      %p59 = pneg %p53
      %p60 = scmp.eq.s32.totalorder %s18, 1
      %p61 = por %p59, %p60
      %p62 = scmp.ne.s32.totalorder %s54, %s57
      %p63 = scmp.eq.s32.totalorder %s18, 0
      %p64 = por %p62, %p63
      %p65 = scmp.ne.s32.totalorder %s54, %s57
      %p66 = scmp.eq.s32.totalorder %s23, 1
      %p67 = por %p65, %p66
      %p68 = scmp.ne.s32.totalorder %s57, %s58
      %p69 = scmp.eq.s32.totalorder %s23, 0
      %p70 = por %p68, %p69
      %p71 = scmp.ne.s32.totalorder %s57, %s58
      %p72 = scmp.eq.s32.totalorder %s24, 1
      %p73 = por %p71, %p72
      %p75 = scmp.ne.s32.totalorder %s58, %s74
      %p76 = scmp.eq.s32.totalorder %s24, 0
      %p77 = por %p75, %p76
      %s78 = ssub.s32 %s18, %s25
      %p79 = scmp.eq.s32.totalorder %s78, 0
      %s81 = sadd.s32 %s80, 1
      %s82 = scalar_select %p79, %s80, %s81
      %p85 = pneg %p79
      %p86 = scmp.eq.s32.totalorder %s18, 1
      %p87 = por %p85, %p86
      %p88 = scmp.ne.s32.totalorder %s80, %s83
      %p89 = scmp.eq.s32.totalorder %s18, 0
      %p90 = por %p88, %p89
      %p91 = scmp.ne.s32.totalorder %s80, %s83
      %p92 = scmp.eq.s32.totalorder %s23, 1
      %p93 = por %p91, %p92
      %p94 = scmp.ne.s32.totalorder %s83, %s84
      %p95 = scmp.eq.s32.totalorder %s23, 0
      %p96 = por %p94, %p95
      %p97 = scmp.ne.s32.totalorder %s83, %s84
      %p98 = scmp.eq.s32.totalorder %s24, 1
      %p99 = por %p97, %p98
      %p101 = scmp.ne.s32.totalorder %s84, %s100
      %p102 = scmp.eq.s32.totalorder %s24, 0
      %p103 = por %p101, %p102
      %p104 = scmp.le.s32.totalorder 1, %s18
      %p105 = scmp.lt.s32.totalorder %s18, 3
      %p106 = pnand %p104, %p105
      %p107 = pneg %p106
      // Predicated region
      $region9: #{tpu_custom_call.1} parent=5 // pred_check
        _
      $region10: #{tpu_custom_call.1} parent=5 // pred_check_branch
        %109 = sbr.rel (%p106) target = $region12
      $region11: #{tpu_custom_call.1} parent=5 // pred_region
        %s110 = ssub.s32 %s18, 1
      $region12: #{tpu_custom_call.1} parent=5 // pred_fallthru
        _
      %p111 = scmp.lt.s32.totalorder %s18, 2
      // Predicated region
      $region13: #{tpu_custom_call.1} parent=5 // pred_check
        %p112 = pneg %p111
      $region14: #{tpu_custom_call.1} parent=5 // pred_check_branch
        %114 = sbr.rel (%p112) target = $region16
      $region15: #{tpu_custom_call.1} parent=5 // pred_region
        // Predicated region
        $region17: #{tpu_custom_call.1} parent=15 // pred_check
          %p115 = pneg %p38
        $region18: #{tpu_custom_call.1} parent=15 // pred_check_branch
          %117 = sbr.rel (%p115) target = $region20
        $region19: #{tpu_custom_call.1} parent=15 // pred_region
          %s118 = sand.u32 %s28, 1
          %s119 = scalar_lea.sflag [#allocation3], %s118
          %s120 = sand.u32 %s28, 1
          %s121 = smul.addr %s120, 16
          %s122 = scalar_lea.vmem [#allocation2], %s121
          %s124 = ssub.s32 256, 256
          %125 = vsyncadd %s119, %s124
          %s126 = smul.addr %s18, 2
          %s127 = smul.addr %s126, 128
          %s128 = scalar_lea.hbm %s0, %s127
          %s129 = sshll.u32 %s122, 4
          %s130 = int_to_ptr.vmem [resolvable:$true] %s129
          %135 = dma.hbm_to_vmem [thread:$0]  %s128, 256, %s130, %s119, 128, 128, 8
        $region20: #{tpu_custom_call.1} parent=15 // pred_fallthru
          _
      $region16: #{tpu_custom_call.1} parent=5 // pred_fallthru
        _
      %p136 = scmp.le.s32.totalorder 1, %s18
      %p137 = scmp.lt.s32.totalorder %s18, 3
      %p138 = pnand %p136, %p137
      %p139 = pneg %p138
      // Predicated region
      $region21: #{tpu_custom_call.1} parent=5 // pred_check
        _
      $region22: #{tpu_custom_call.1} parent=5 // pred_check_branch
        %141 = sbr.rel (%p138) target = $region24
      $region23: #{tpu_custom_call.1} parent=5 // pred_region
        %s142 = ssub.s32 %s18, 1
        %s143 = sand.u32 %s31, 1
        %s144 = scalar_lea.sflag [#allocation3], %s143
        %s145 = sand.u32 %s31, 1
        %s146 = smul.addr %s145, 16
        %s147 = scalar_lea.vmem [#allocation2], %s146
        // Predicated region
        $region25: #{tpu_custom_call.1} parent=23 // pred_check
          %p148 = pneg %p44
        $region26: #{tpu_custom_call.1} parent=23 // pred_check_branch
          %150 = sbr.rel (%p148) target = $region28
        $region27: #{tpu_custom_call.1} parent=23 // pred_region
          %151 = dma.done %s144, 256
        $region28: #{tpu_custom_call.1} parent=23 // pred_fallthru
          _
        %s152 = sand.u32 %s31, 1
        %s153 = scalar_lea.sflag [#allocation3], %s152
        %s154 = sand.u32 %s31, 1
        %s155 = smul.addr %s154, 16
        %s156 = scalar_lea.vmem [#allocation2], %s155
        %p157 = pneg %p44
        %p158 = pneg %p41
        %p159 = pneg %p70
        %p160 = pneg %p67
        %s161 = sand.u32 %s57, 1
        %s162 = scalar_lea.sflag [#allocation4], %s161
        %s163 = sand.u32 %s57, 1
        %s164 = smul.addr %s163, 8
        %s165 = scalar_lea.vmem [#allocation5], %s164
        %p166 = pneg %p96
        %p167 = pneg %p93
        %s168 = sand.u32 %s83, 1
        %s169 = scalar_lea.sflag [#allocation7], %s168
        %s170 = sand.u32 %s83, 1
        %s171 = smul.addr %s170, 8
        %s172 = scalar_lea.vmem [#allocation6], %s171
        %v173 = vld [vmem:[%s147] sm:$0xff]
        %v174 = vld [vmem:[%s147 + $0x8] sm:$0xff]
        %177 = vrot.lane.b32.xlu0 %v173, 2
        %v178 = vpop.permute.xlu0 %177
        %179 = vrot.lane.b32.xlu0 %v174, 2
        %v180 = vpop.permute.xlu0 %179
        %v183 = vsub.f32 %v173, %v178
        %v184 = vsub.f32 %v174, %v180
        %v185 = vmul.f32 %v183, 0.2431694
        %v186 = vmul.f32 %v184, 0.2431694
        %187 = vrot.lane.b32.xlu0 %v173, 4
        %v188 = vpop.permute.xlu0 %187
        %189 = vrot.lane.b32.xlu0 %v174, 4
        %v190 = vpop.permute.xlu0 %189
        %v193 = vsub.f32 %v173, %v188
        %v194 = vsub.f32 %v174, %v190
        %v195 = vmul.f32 %v193, 0.108458064
        %v196 = vmul.f32 %v194, 0.108458064
        %199 = vrot.lane.b32.xlu0 %v195, 127
        %v200 = vpop.permute.xlu0 %199
        %201 = vrot.lane.b32.xlu0 %v196, 127
        %v202 = vpop.permute.xlu0 %201
        %v205 = vadd.f32 %v185, %v200
        %v206 = vadd.f32 %v186, %v202
        %207 = vrot.lane.b32.xlu0 %v173, 6
        %v208 = vpop.permute.xlu0 %207
        %209 = vrot.lane.b32.xlu0 %v174, 6
        %v210 = vpop.permute.xlu0 %209
        %v213 = vsub.f32 %v173, %v208
        %v214 = vsub.f32 %v174, %v210
        %v215 = vmul.f32 %v213, 0.013304823
        %v216 = vmul.f32 %v214, 0.013304823
        %219 = vrot.lane.b32.xlu0 %v215, 126
        %v220 = vpop.permute.xlu0 %219
        %221 = vrot.lane.b32.xlu0 %v216, 126
        %v222 = vpop.permute.xlu0 %221
        %v225 = vadd.f32 %v205, %v220
        %v226 = vadd.f32 %v206, %v222
        %229 = vrot.lane.b32.xlu0 %v225, 123
        %v230 = vpop.permute.xlu0 %229
        %231 = vrot.lane.b32.xlu0 %v226, 123
        %v232 = vpop.permute.xlu0 %231
        %vm235 = vcmask 64516
        %236 = vst.msk [vmem:[%s165 - $0x4] sm:$0xf0] %vm235, %v230
        %vm237 = vcmask 60416
        %238 = vst.msk [vmem:[%s165 + $0x4] sm:$0xf] %vm237, %v232
        %vm239 = vcmask 1041408
        %v240 = vrot.slane %v173, 6
        %v241 = vrot.slane %v174, 6
        %v242 = vsel %vm239, %v240, %v241
        %v245 = vsub.f32 %v173, %v240
        %v246 = vsub.f32 %v174, %v242
        %v247 = vmul.f32 %v245, 0.2431694
        %v248 = vmul.f32 %v246, 0.2431694
        %vm249 = vcmask 1043456
        %v250 = vrot.slane %v173, 4
        %v251 = vrot.slane %v174, 4
        %v252 = vsel %vm249, %v250, %v251
        %v255 = vsub.f32 %v173, %v250
        %v256 = vsub.f32 %v174, %v252
        %v257 = vmul.f32 %v255, 0.108458064
        %v258 = vmul.f32 %v256, 0.108458064
        %vm261 = vcmask 1046528
        %v262 = vrot.slane %v257, 1
        %v263 = vrot.slane %v258, 1
        %v264 = vsel %vm261, %v262, %v263
        %v267 = vadd.f32 %v247, %v264
        %v268 = vadd.f32 %v248, %v263
        %vm269 = vcmask 1045504
        %v270 = vrot.slane %v173, 2
        %v271 = vrot.slane %v174, 2
        %v272 = vsel %vm269, %v270, %v271
        %v275 = vsub.f32 %v173, %v270
        %v276 = vsub.f32 %v174, %v272
        %v277 = vmul.f32 %v275, 0.013304823
        %v278 = vmul.f32 %v276, 0.013304823
        %v281 = vrot.slane %v277, 2
        %v282 = vrot.slane %v278, 2
        %v283 = vsel %vm269, %v281, %v282
        %v286 = vadd.f32 %v267, %v283
        %v287 = vadd.f32 %v268, %v282
        %290 = vrot.lane.b32.xlu0 %v286, 124
        %v291 = vpop.permute.xlu0 %290
        %292 = vrot.lane.b32.xlu0 %v287, 124
        %v293 = vpop.permute.xlu0 %292
        %vm296 = vcmask 64517
        %297 = vst.msk [vmem:[%s172 - $0x5] sm:$0xe0] %vm296, %v291
        %vm298 = vcmask 61440
        %299 = vst.msk [vmem:[%s172 + $0x3] sm:$0x1f] %vm298, %v293
        %s300 = sand.u32 %s57, 1
        %s301 = scalar_lea.sflag [#allocation4], %s300
        %s302 = sand.u32 %s57, 1
        %s303 = smul.addr %s302, 8
        %s304 = scalar_lea.vmem [#allocation5], %s303
        %s305 = sand.u32 %s83, 1
        %s306 = scalar_lea.sflag [#allocation7], %s305
        %s307 = sand.u32 %s83, 1
        %s308 = smul.addr %s307, 8
        %s309 = scalar_lea.vmem [#allocation6], %s308
        // Predicated region
        $region29: #{tpu_custom_call.1} parent=23 // pred_check
          %p310 = pneg %p67
        $region30: #{tpu_custom_call.1} parent=23 // pred_check_branch
          %312 = sbr.rel (%p310) target = $region32
        $region31: #{tpu_custom_call.1} parent=23 // pred_region
          %s314 = ssub.s32 128, 128
          %315 = vsyncadd %s301, %s314
          %s316 = smul.addr %s23, 128
          %s317 = scalar_lea.hbm %s1, %s316
          %s319 = sshll.u32 %s304, 4
          %s320 = int_to_ptr.vmem [resolvable:$true] %s319
          %322 = dma.vmem_to_hbm [thread:$0]  %s320, 128, %s317, %s301
        $region32: #{tpu_custom_call.1} parent=23 // pred_fallthru
          _
        // Predicated region
        $region33: #{tpu_custom_call.1} parent=23 // pred_check
          %p323 = pneg %p93
        $region34: #{tpu_custom_call.1} parent=23 // pred_check_branch
          %325 = sbr.rel (%p323) target = $region36
        $region35: #{tpu_custom_call.1} parent=23 // pred_region
          %s327 = ssub.s32 128, 128
          %328 = vsyncadd %s306, %s327
          %s329 = smul.addr %s23, 128
          %s330 = scalar_lea.hbm %s2, %s329
          %s332 = sshll.u32 %s309, 4
          %s333 = int_to_ptr.vmem [resolvable:$true] %s332
          %335 = dma.vmem_to_hbm [thread:$0]  %s333, 128, %s330, %s306
        $region36: #{tpu_custom_call.1} parent=23 // pred_fallthru
          _
      $region24: #{tpu_custom_call.1} parent=5 // pred_fallthru
        _
      %p336 = scmp.le.s32.totalorder 2, %s18
      // Predicated region
      $region37: #{tpu_custom_call.1} parent=5 // pred_check
        %p337 = pneg %p336
      $region38: #{tpu_custom_call.1} parent=5 // pred_check_branch
        %339 = sbr.rel (%p337) target = $region40
      $region39: #{tpu_custom_call.1} parent=5 // pred_region
        %s340 = ssub.s32 %s18, 2
        // Predicated region
        $region41: #{tpu_custom_call.1} parent=39 // pred_check
          %p341 = pneg %p73
        $region42: #{tpu_custom_call.1} parent=39 // pred_check_branch
          %343 = sbr.rel (%p341) target = $region44
        $region43: #{tpu_custom_call.1} parent=39 // pred_region
          %s344 = sand.u32 %s58, 1
          %s345 = scalar_lea.sflag [#allocation4], %s344
          %s346 = sand.u32 %s58, 1
          %s347 = smul.addr %s346, 8
          %s348 = scalar_lea.vmem [#allocation5], %s347
          %349 = dma.done %s345, 128
        $region44: #{tpu_custom_call.1} parent=39 // pred_fallthru
          _
        // Predicated region
        $region45: #{tpu_custom_call.1} parent=39 // pred_check
          %p350 = pneg %p99
        $region46: #{tpu_custom_call.1} parent=39 // pred_check_branch
          %352 = sbr.rel (%p350) target = $region48
        $region47: #{tpu_custom_call.1} parent=39 // pred_region
          %s353 = sand.u32 %s84, 1
          %s354 = scalar_lea.sflag [#allocation7], %s353
          %s355 = sand.u32 %s84, 1
          %s356 = smul.addr %s355, 8
          %s357 = scalar_lea.vmem [#allocation6], %s356
          %358 = dma.done %s354, 128
        $region48: #{tpu_custom_call.1} parent=39 // pred_fallthru
          _
      $region40: #{tpu_custom_call.1} parent=5 // pred_fallthru
        _
    $region6: #{tpu_custom_call.1} parent=1 // loop_footer
      %s22 = sadd.s32 1, %s18
    $region7: #{tpu_custom_call.1} parent=1 // loop_footer_branch
      %17 = sbr.rel target = $region3
    $region8: #{tpu_custom_call.1} parent=1 // loop_exit
      _
    %359 = vsyncpa [#allocation3], 1
    %s360 = scalar_lea.sflag [#allocation3], 1
    %361 = vsyncpa %s360, 1
    %362 = vsyncpa [#allocation4], 1
    %s363 = scalar_lea.sflag [#allocation4], 1
    %364 = vsyncpa %s363, 1
    %365 = vsyncpa [#allocation7], 1
    %s366 = scalar_lea.sflag [#allocation7], 1
    %367 = vsyncpa %s366, 1

</llo_original>
